<compile_context>
chip_gen: v7x
topology: tpu7x:2x2x1
jax: 0.10.0
libtpu: 0.0.40
codegen_flags: <defaults>
</compile_context>

<pallas_src>
import functools

import jax
import jax.numpy as jnp
import numpy as np
from jax.experimental import pallas as pl
from jax.experimental.pallas import tpu as pltpu


def _vmem_capacity_bytes():
    """Physical VMEM per TensorCore (generation-aware) with a safe fallback."""
    try:
        info = pltpu.get_tpu_info()
        for attr in ("vmem_capacity_bytes", "vmem_size_bytes", "vmem_bytes"):
            v = getattr(info, attr, None)
            if v:
                return int(v)
    except Exception:
        pass
    return 64 << 20  # conservative default: v7x per-TC VMEM


# ---------------------------------------------------------------------------
# small_tensor_op:  x + sigmoid(x)
# ---------------------------------------------------------------------------
def _small_kernel(x_ref, o_ref):
    x = x_ref[...]
    o_ref[...] = x + jax.nn.sigmoid(x)


def small_tensor_op(x):
    n = x.shape[0]
    return pl.pallas_call(
        _small_kernel,
        out_shape=jax.ShapeDtypeStruct((n, n), jnp.float32),
        grid_spec=pltpu.PrefetchScalarGridSpec(
            num_scalar_prefetch=0,
            grid=(1,),
            in_specs=[pl.BlockSpec((n, n), lambda i: (0, 0))],
            out_specs=pl.BlockSpec((n, n), lambda i: (0, 0)),
        ),
    )(x)


# ---------------------------------------------------------------------------
# medium_tensor_op:  sin(x @ x^T) + tanh(x ** 0.9879865) * 0.5
# Tiled over 256-row output blocks; the full tensor (rhs) stays resident.
# ---------------------------------------------------------------------------
def _medium_kernel(xb_ref, x_ref, o_ref):
    xb = xb_ref[...]                      # (bm, N) row block
    x = x_ref[...]                        # (N, N)  full tensor
    # xb @ x^T without materializing a transpose: contract dim 1 of both operands.
    mm = jax.lax.dot_general(xb, x, (((1,), (1,)), ((), ())),
                             preferred_element_type=jnp.float32)
    # NB: negative base with non-integer exponent -> NaN, matching torch.pow.
    # Kept in f32: sin() of the ~N-magnitude diagonal of x@x^T would amplify
    # bf16 rounding into O(1) output error.
    o_ref[...] = jnp.sin(mm) + jnp.tanh(jnp.power(xb, 0.9879865)) * 0.5


def medium_tensor_op(x, bm=256):
    n = x.shape[0]
    bm = min(bm, n)
    grid_m = pl.cdiv(n, bm)
    vmem_cap = _vmem_capacity_bytes()
    vmem_est = 2 * n * n * 4 + 4 * bm * n * 4      # full x (x2 bufs) + row/out blocks
    vmem_limit = int(min(max(vmem_est + (8 << 20), 32 << 20), int(0.85 * vmem_cap)))
    return pl.pallas_call(
        _medium_kernel,
        out_shape=jax.ShapeDtypeStruct((n, n), jnp.float32),
        grid_spec=pltpu.PrefetchScalarGridSpec(
            num_scalar_prefetch=0,
            grid=(grid_m,),
            in_specs=[
                pl.BlockSpec((bm, n), lambda i: (i, 0)),   # row block of x
                pl.BlockSpec((n, n), lambda i: (0, 0)),    # full x (rhs, invariant)
            ],
            out_specs=pl.BlockSpec((bm, n), lambda i: (i, 0)),
        ),
        compiler_params=pltpu.CompilerParams(
            dimension_semantics=("parallel",),
            vmem_limit_bytes=vmem_limit,
        ),
    )(x, x)


# ---------------------------------------------------------------------------
# complex_tensor_op:
#   xn   = x / (||x||_2(rows) + 1e-8)
#   attn = softmax(xn @ xn^T, dim=-1)
#   t    = attn @ xn
#   ln   = (t - mean(t)) / sqrt(var(t) + 1e-5)        (per row)
#   t    = t + ln * scale                              (scale = randint(1,11))
#   out  = relu(t) * sigmoid(t)
#
# Step 1: row-normalization kernel (once, bf16 output, large mem-bound tiles).
# Step 2: attention tiled over (q-block, k-block).  Rows are unit-norm, so the
#         scores are in [-1, 1] and exp(s) is overflow-free: no online-softmax
#         max tracking / rescaling needed.  The accumulator lives directly in
#         o_ref (resident across the k axis); epilogue (layernorm + residual +
#         relu*sigmoid) runs on the last k step.
# ---------------------------------------------------------------------------
def _rownorm_kernel(x_ref, o_ref):
    x = x_ref[...]
    norm = jnp.sqrt(jnp.sum(x * x, axis=-1, keepdims=True))
    o_ref[...] = (x * pl.reciprocal(norm + 1e-8, approx=True)).astype(o_ref.dtype)


def _row_normalize_bf16(x, bm, vmem_cap):
    rows, cols = x.shape            # rows is a multiple of bm (caller ensures)
    vmem_est = 2 * bm * cols * 4 + 2 * bm * cols * 2
    vmem_limit = int(min(max(vmem_est + (8 << 20), 32 << 20), int(0.85 * vmem_cap)))
    return pl.pallas_call(
        _rownorm_kernel,
        out_shape=jax.ShapeDtypeStruct((rows, cols), jnp.bfloat16),
        grid_spec=pltpu.PrefetchScalarGridSpec(
            num_scalar_prefetch=0,
            grid=(rows // bm,),
            in_specs=[pl.BlockSpec((bm, cols), lambda i: (i, 0))],
            out_specs=pl.BlockSpec((bm, cols), lambda i: (i, 0)),
        ),
        compiler_params=pltpu.CompilerParams(
            dimension_semantics=("parallel",),
            vmem_limit_bytes=vmem_limit,
        ),
    )(x)


def _complex_attn_kernel(scale_ref, q_ref, k_ref, o_ref, l_sc, *, n_valid, n_rows):
    ki = pl.program_id(1)

    @pl.when(ki == 0)
    def _init():
        l_sc[...] = jnp.zeros(l_sc.shape, jnp.float32)
        o_ref[...] = jnp.zeros(o_ref.shape, jnp.float32)

    q = q_ref[...]                        # (bq, N) bf16, rows already L2-normalized
    k = k_ref[...]                        # (bk, N) bf16, doubles as V
    # scores = q @ k^T: contract the feature dim of both -> no transpose temp.
    s = jax.lax.dot_general(q, k, (((1,), (1,)), ((), ())),
                            preferred_element_type=jnp.float32)   # (bq, bk)

    if n_valid < n_rows:                  # static: mask zero-padded key rows
        bk = k.shape[0]
        col = ki * bk + jax.lax.broadcasted_iota(jnp.int32, s.shape, 1)
        s = jnp.where(col < n_valid, s, -jnp.inf)

    # Rows are unit-norm -> s in [-1, 1], so exp(s) cannot overflow and
    # softmax(s) == exp(s) / sum(exp(s)) exactly: no running-max / rescale.
    p = jnp.exp(s)                                       # masked cols -> exp(-inf)=0
    l_sc[...] = l_sc[...] + jnp.sum(p, axis=-1, keepdims=True)
    o_ref[...] = o_ref[...] + jnp.dot(
        p.astype(jnp.bfloat16), k, preferred_element_type=jnp.float32)

    @pl.when(ki == pl.num_programs(1) - 1)
    def _finalize():
        t = o_ref[...] * pl.reciprocal(l_sc[...], approx=True)    # softmax(..) @ V
        # Single-pass layernorm statistics: var = E[x^2] - E[x]^2.
        inv_cols = 1.0 / t.shape[-1]
        mean = jnp.sum(t, axis=-1, keepdims=True) * inv_cols
        meansq = jnp.sum(t * t, axis=-1, keepdims=True) * inv_cols
        var = meansq - mean * mean
        t_norm = (t - mean) * jax.lax.rsqrt(var + 1e-5)
        scale = scale_ref[0].astype(jnp.float32)
        t = t + t_norm * scale
        o_ref[...] = jnp.maximum(t, 0.0) * jax.nn.sigmoid(t)


def complex_tensor_op(x, scale):
    n = x.shape[0]
    vmem_cap = _vmem_capacity_bytes()

    bk = 256                              # key-row tile
    # Bigger query tile halves K re-streaming (HBM-bound on v5e/v6e, 128 MiB VMEM);
    # stay at 256 under a 64 MiB budget (v7x / unknown generation).
    bq = 512 if vmem_cap >= (96 << 20) else 256

    def attn_vmem(bq_):
        return (2 * bq_ * n * 2           # Q blocks, bf16, double-buffered
                + 2 * bk * n * 2          # K (=V) blocks, bf16, double-buffered
                + 2 * bq_ * n * 4)        # out/accumulator blocks, f32, double-buffered

    while bq > 128 and attn_vmem(bq) > int(0.7 * vmem_cap):
        bq //= 2

    blk = max(bq, bk)
    n_pad = ((n + blk - 1) // blk) * blk
    if n_pad != n:                        # pad key/query rows with zeros (no-op if aligned)
        x = jnp.pad(x, ((0, n_pad - n), (0, 0)))

    # Row-norm pre-pass is purely HBM-bound: use the largest row tile that
    # divides n_pad and comfortably fits VMEM.
    rn_bm = blk
    for cand in (1024, 512):
        if cand > rn_bm and n_pad % cand == 0 and \
           cand * n * (2 * 4 + 2 * 2) <= int(0.6 * vmem_cap):
            rn_bm = cand
            break
    xn = _row_normalize_bf16(x, rn_bm, vmem_cap)   # (n_pad, n), normalized once, bf16

    kernel = functools.partial(_complex_attn_kernel, n_valid=n, n_rows=n_pad)
    vmem_est = attn_vmem(bq)
    vmem_limit = int(min(max(vmem_est + (16 << 20), 32 << 20), int(0.85 * vmem_cap)))

    out = pl.pallas_call(
        kernel,
        out_shape=jax.ShapeDtypeStruct((n_pad, n), jnp.float32),
        grid_spec=pltpu.PrefetchScalarGridSpec(
            num_scalar_prefetch=1,                          # `scale` lives in SMEM
            grid=(n_pad // bq, n_pad // bk),
            in_specs=[
                pl.BlockSpec((bq, n), lambda qi, ki, s: (qi, 0)),   # Q rows
                pl.BlockSpec((bk, n), lambda qi, ki, s: (ki, 0)),   # K (=V) rows
            ],
            out_specs=pl.BlockSpec((bq, n), lambda qi, ki, s: (qi, 0)),
            scratch_shapes=[
                pltpu.VMEM((bq, 1), jnp.float32),    # softmax denominator (row sum)
            ],
        ),
        compiler_params=pltpu.CompilerParams(
            dimension_semantics=("parallel", "arbitrary"),
            vmem_limit_bytes=vmem_limit,
        ),
    )(scale, xn, xn)
    return out[:n] if n_pad != n else out


# ---------------------------------------------------------------------------
# program.forward equivalent
# ---------------------------------------------------------------------------
def program_forward(size, key):
    k_x, k_r = jax.random.split(key)
    x = jax.random.normal(k_x, (size, size), dtype=jnp.float32)
    if size >= 1000:
        # torch.randint(1, 11, (1,)).item() -> device-side draw, passed to the
        # kernel as an SMEM scalar (no host sync, one compile for all 10 values).
        scale = jax.random.randint(k_r, (1,), 1, 11, dtype=jnp.int32)
        return complex_tensor_op(x, scale), ("complex", x, scale)
    elif size >= 100:
        return medium_tensor_op(x), ("medium", x, None)
    elif size >= 10:
        return small_tensor_op(x), ("small", x, None)
    return jnp.zeros((1,), jnp.float32), ("zero", x, None)


# ---------------------------------------------------------------------------
# Pure-JAX references (for numerical validation)
# ---------------------------------------------------------------------------
def _ref_small(x):
    return x + jax.nn.sigmoid(x)


def _ref_medium(x):
    return jnp.sin(x @ x.T) + jnp.tanh(jnp.power(x, 0.9879865)) * 0.5


def _ref_complex(x, scale):
    xn = x / (jnp.linalg.norm(x, axis=-1, keepdims=True) + 1e-8)
    attn = jax.nn.softmax(xn @ xn.T, axis=-1)
    t = attn @ xn
    mean = jnp.mean(t, axis=-1, keepdims=True)
    var = jnp.mean((t - mean) ** 2, axis=-1, keepdims=True)
    tn = (t - mean) / jnp.sqrt(var + 1e-5)
    t = t + tn * scale
    return jnp.maximum(t, 0.0) * jax.nn.sigmoid(t)


if __name__ == "__main__":
    key = jax.random.PRNGKey(0)

    # size < 10 branch -> zeros(1)
    out_zero, _ = program_forward(4, key)
    out_zero = jax.block_until_ready(out_zero)
    assert out_zero.shape == (1,) and float(out_zero[0]) == 0.0

    # small branch (10 <= size < 100)
    out_s, (_, xs, _) = program_forward(16, key)
    out_s = jax.block_until_ready(out_s)
    np.testing.assert_allclose(np.asarray(out_s), np.asarray(_ref_small(xs)),
                               rtol=1e-5, atol=1e-5)

    # medium branch (100 <= size < 1000)
    out_m, (_, xm, _) = program_forward(256, key)
    out_m = jax.block_until_ready(out_m)
    np.testing.assert_allclose(np.asarray(out_m), np.asarray(_ref_medium(xm)),
                               rtol=2e-2, atol=2e-2, equal_nan=True)

    # complex branch (size >= 1000) -- bf16 MXU inputs, hence the looser atol
    out_c, (_, xc, scale) = program_forward(1024, key)
    out_c = jax.block_until_ready(out_c)
    ref_c = _ref_complex(xc, scale[0].astype(jnp.float32))
    np.testing.assert_allclose(np.asarray(out_c), np.asarray(ref_c),
                               rtol=2.5e-2, atol=1e-1)

    print("KERNEL_OK")
</pallas_src>

<mosaic_0001>
module attributes {stable_mosaic.version = 11 : i64} {
  func.func @_small_kernel(%arg0: i32, %arg1: memref<16x16xf32, #tpu.memory_space<vmem>>, %arg2: memref<16x16xf32, #tpu.memory_space<vmem>>) attributes {dimension_semantics = [#tpu.dimension_semantics<arbitrary>], iteration_bounds = array<i64: 1>, scalar_prefetch = 0 : i64, scratch_operands = 0 : i64, tpu.core_type = #tpu.core_type<tc>, window_params = [{pipeline_mode = #tpu.pipeline_mode<synchronous>, transform_indices = @transform_0, window_bounds = array<i64: 16, 16>}, {pipeline_mode = #tpu.pipeline_mode<synchronous>, transform_indices = @transform_1, window_bounds = array<i64: 16, 16>}]} {
    %c0 = arith.constant 0 : index
    %c0_0 = arith.constant 0 : index
    %0 = vector.load %arg1[%c0, %c0_0] : memref<16x16xf32, #tpu.memory_space<vmem>>, vector<16x16xf32>
    %1 = arith.negf %0 : vector<16x16xf32>
    %2 = math.exp %1 : vector<16x16xf32>
    %cst = arith.constant 1.000000e+00 : f32
    %3 = vector.broadcast %cst : f32 to vector<16x16xf32>
    %4 = arith.addf %3, %2 : vector<16x16xf32>
    %5 = arith.divf %3, %4 : vector<16x16xf32>
    %6 = arith.addf %0, %5 : vector<16x16xf32>
    %c0_1 = arith.constant 0 : index
    %c0_2 = arith.constant 0 : index
    %7 = vector.load %arg2[%c0_1, %c0_2] : memref<16x16xf32, #tpu.memory_space<vmem>>, vector<16x16xf32>
    tpu.vector_store %arg2[%c0_1, %c0_2], %6 {strides = array<i32>} : memref<16x16xf32, #tpu.memory_space<vmem>>, vector<16x16xf32>,
    return
  }
  func.func @transform_0(%arg0: i32) -> (i32, i32) {
    %c0_i32 = arith.constant 0 : i32
    %c0_i32_0 = arith.constant 0 : i32
    %c0_i32_1 = arith.constant 0 : i32
    return %c0_i32, %c0_i32_0 : i32, i32
  }
  func.func @transform_1(%arg0: i32) -> (i32, i32) {
    %c0_i32 = arith.constant 0 : i32
    %c0_i32_0 = arith.constant 0 : i32
    %c0_i32_1 = arith.constant 0 : i32
    return %c0_i32, %c0_i32_0 : i32, i32
  }
}

</mosaic_0001>

<llo_original>
// kernel: tpu_custom_call.1
$region0: #{tpu_custom_call.1}
  #allocation0 [shape = 'u32[]', space=smem, size = 0x4, offset = 0x4, fixed_abs, tag = 'smem constant byte address 0x4 - core index']
  #allocation1 [shape = 'u32[144,128]{1,0:T(1,128)}', space=vmem, size = 0x12000, scoped, tag = 'internal scratch']
  %s0 = inlined_call_operand.hbm [shape: f32[16,16], index: 0, kind: input, shape index: {}]
  %s1 = inlined_call_operand.hbm [shape: f32[16,16], index: 1, kind: output, shape index: {}]
  %s2 = sld [smem:[#allocation0]]
  $region18: #{tpu_custom_call.1} parent=0
    _
  %s4 = ssub.s32 1, %s2
  %s5 = scalar_select 0, %s4, %s2
  $region1: #{tpu_custom_call.1} parent=0
    #allocation2 [shape = 'u8[8192]{0}', space=vmem, size = 0x2000, scoped, tag = 'input window, operand 0, single buffered']
    #allocation3 [shape = 's32[1]{0}', space=sflag, size = 0x4, scoped, tag = 'scoped memory for tpu_custom_call.1']
    #allocation4 [shape = 's32[1]{0}', space=sflag, size = 0x4, scoped, tag = 'scoped memory for tpu_custom_call.1']
    #allocation5 [shape = 'u8[8192]{0}', space=vmem, size = 0x2000, scoped, tag = 'output window, operand 0, single buffered']
    %6 = vsyncpa [#allocation3], 0
    %7 = vsyncpa [#allocation4], 0
    // Predicated region
    $region2: #{tpu_custom_call.1} parent=1 // pred_check
      _
    $region3: #{tpu_custom_call.1} parent=1 // pred_check_branch
      %9 = sbr.rel (0) target = $region5
    $region4: #{tpu_custom_call.1} parent=1 // pred_region
      %s11 = ssub.s32 256, 256
      %12 = vsyncadd [#allocation3], %s11
      %s13 = sshll.u32 [#allocation2], 4
      %s14 = int_to_ptr.vmem [resolvable:$true] %s13
      %19 = dma.hbm_to_vmem [thread:$0]  %s0, 256, %s14, [#allocation3], 128, 128, 8
    $region5: #{tpu_custom_call.1} parent=1 // pred_fallthru
      _
    // Predicated region
    $region6: #{tpu_custom_call.1} parent=1 // pred_check
      _
    $region7: #{tpu_custom_call.1} parent=1 // pred_check_branch
      %21 = sbr.rel (0) target = $region9
    $region8: #{tpu_custom_call.1} parent=1 // pred_region
      %22 = dma.done [#allocation3], 256
    $region9: #{tpu_custom_call.1} parent=1 // pred_fallthru
      _
    %v23 = vld [vmem:[#allocation2] sm:$0xff]
    %v24 = vld [vmem:[#allocation2 + $0x8] sm:$0xff]
    %v25 = vxor.u32 %v23, 2147483648
    %v26 = vxor.u32 %v24, 2147483648
    %v27 = vmul.f32 %v25, 1.442695
    %v28 = vpow.pop %v27
    %v29 = vmul.f32 %v26, 1.442695
    %v30 = vpow.pop %v29
    %v31 = vadd.f32 %v28, 1.0
    %v32 = vadd.f32 %v30, 1.0
    %v33 = vrcp.pop %v31
    %v34 = vmul.f32 1.0, %v33
    %v35 = vrcp.pop %v32
    %v36 = vmul.f32 1.0, %v35
    %v37 = vadd.f32 %v23, %v34
    %v38 = vadd.f32 %v24, %v36
    %vm39 = vcmask 130048
    %40 = vst.msk [vmem:[#allocation5] sm:$0xff] %vm39, %v37
    %41 = vst.msk [vmem:[#allocation5 + $0x8] sm:$0xff] %vm39, %v38
    // Predicated region
    $region10: #{tpu_custom_call.1} parent=1 // pred_check
      _
    $region11: #{tpu_custom_call.1} parent=1 // pred_check_branch
      %43 = sbr.rel (0) target = $region13
    $region12: #{tpu_custom_call.1} parent=1 // pred_region
      %s45 = ssub.s32 256, 256
      %46 = vsyncadd [#allocation4], %s45
      %s47 = sshll.u32 [#allocation5], 4
      %s48 = int_to_ptr.vmem [resolvable:$true] %s47
      %53 = dma.vmem_to_hbm [thread:$0]  %s48, 256, %s1, [#allocation4], 128, 128, 8
    $region13: #{tpu_custom_call.1} parent=1 // pred_fallthru
      _
    // Predicated region
    $region14: #{tpu_custom_call.1} parent=1 // pred_check
      _
    $region15: #{tpu_custom_call.1} parent=1 // pred_check_branch
      %55 = sbr.rel (0) target = $region17
    $region16: #{tpu_custom_call.1} parent=1 // pred_region
      %56 = dma.done [#allocation4], 256
    $region17: #{tpu_custom_call.1} parent=1 // pred_fallthru
      _
    %57 = vsyncpa [#allocation3], 1
    %58 = vsyncpa [#allocation4], 1

</llo_original>
